<compile_context>
chip_gen: v6e
topology: v6e:2x2x1
jax: 0.10.0
libtpu: 0.0.40
codegen_flags: <defaults>
</compile_context>

<pallas_src>
import functools

import jax
import jax.numpy as jnp
from jax import lax
from jax.experimental import pallas as pl
from jax.experimental.pallas import tpu as pltpu


def _gradient_loss_tile_kernel(x_ref, xx_ref, out_ref, *, use_roll):
    # x_ref / xx_ref: one (H, W) channel plane in VMEM (leading N*C dim squeezed).
    d = x_ref[...].astype(jnp.float32) - xx_ref[...].astype(jnp.float32)
    h, w = d.shape

    if use_roll:
        # Lane (+-1 along W) neighbours via XLU rolls; the wrap-around only
        # contaminates columns 0 and W-1, which are masked out below.
        horiz = pltpu.roll(d, 1, axis=1) + pltpu.roll(d, -1, axis=1) - 4.0 * d
        # +-1 H shifts as sublane slices, restricted to interior output rows.
        lap = d[:-2, :] + d[2:, :] + horiz[1:-1, :]          # (H-2, W)
        w_idx = lax.broadcasted_iota(jnp.int32, lap.shape, 1)
        valid = (w_idx >= 1) & (w_idx <= w - 2)
        abs_lap = jnp.where(valid, jnp.abs(lap), 0.0)
    else:
        # Small-W path: direct shifted slices of the single difference plane.
        lap = (d[:-2, 1:-1] + d[2:, 1:-1] + d[1:-1, :-2] + d[1:-1, 2:]
               - 4.0 * d[1:-1, 1:-1])                        # (H-2, W-2)
        abs_lap = jnp.abs(lap)

    # Per-tile partial sum (final mean is applied once in the wrapper).
    out_ref[0] = jnp.sum(abs_lap, keepdims=True)             # (1, 1) block view


def gradient_loss(x, xx):
    assert x.shape == xx.shape and x.ndim == 4
    n, c, h, w = x.shape
    assert c == 3, "GradientLoss is defined for 3-channel inputs (groups=3)"
    assert h >= 3 and w >= 3, "valid 3x3 conv needs H, W >= 3"
    nc = n * c

    xr = x.reshape(nc, h, w)
    xxr = xx.reshape(nc, h, w)

    use_roll = (w % 128 == 0)  # lane-dense planes: use XLU rolls for W shifts

    kernel = functools.partial(_gradient_loss_tile_kernel, use_roll=use_roll)

    bytes_in = 2 * x.size * x.dtype.itemsize
    cost = pl.CostEstimate(
        flops=8 * x.size,          # sub + 4 adds + mul + abs + accumulate
        transcendentals=0,
        bytes_accessed=bytes_in + nc * 4,
    )

    partials = pl.pallas_call(
        kernel,
        out_shape=jax.ShapeDtypeStruct((nc, 1, 1), jnp.float32),
        grid_spec=pltpu.PrefetchScalarGridSpec(
            num_scalar_prefetch=0,
            grid=(nc,),
            in_specs=[
                pl.BlockSpec((None, h, w), lambda i: (i, 0, 0)),
                pl.BlockSpec((None, h, w), lambda i: (i, 0, 0)),
            ],
            out_specs=pl.BlockSpec((1, 1, 1), lambda i: (i, 0, 0)),
        ),
        compiler_params=pltpu.CompilerParams(
            dimension_semantics=("parallel",),
            vmem_limit_bytes=32 * 1024 * 1024,
        ),
        cost_estimate=cost,
    )(xr, xxr)

    count = nc * (h - 2) * (w - 2)
    inv_count = jnp.float32(1.0 / count)
    return jnp.sum(partials) * inv_count   # L1Loss default reduction='mean'


def _reference(x, xx):
    # Pure-JAX reference mirroring F.conv2d(..., groups=3) with the fixed weight.
    k = jnp.array([[0.0, 1.0, 0.0], [1.0, -4.0, 1.0], [0.0, 1.0, 0.0]], jnp.float32)
    wgt = jnp.broadcast_to(k, (3, 1, 3, 3))  # OIHW, groups=3 -> I=1
    conv = lambda v: lax.conv_general_dilated(
        v.astype(jnp.float32), wgt, window_strides=(1, 1), padding="VALID",
        feature_group_count=3, dimension_numbers=("NCHW", "OIHW", "NCHW"))
    return jnp.mean(jnp.abs(conv(x) - conv(xx)))


if __name__ == "__main__":
    key = jax.random.PRNGKey(0)
    k1, k2 = jax.random.split(key)
    # NCHW, 3 channels as required by groups=3
    x = jax.random.normal(k1, (2, 3, 16, 16), dtype=jnp.float32)
    xx = jax.random.normal(k2, (2, 3, 16, 16), dtype=jnp.float32)

    out = gradient_loss(x, xx)
    jax.block_until_ready(out)

    ref = _reference(x, xx)
    assert jnp.allclose(out, ref, rtol=1e-5, atol=1e-5), (out, ref)
    print("KERNEL_OK")
</pallas_src>

<mosaic_0001>
module attributes {stable_mosaic.version = 11 : i64} {
  func.func @_gradient_loss_tile_kernel(%arg0: i32, %arg1: memref<1x16x16xf32, #tpu.memory_space<vmem>>, %arg2: memref<1x16x16xf32, #tpu.memory_space<vmem>>, %arg3: memref<1x1x1xf32, #tpu.memory_space<vmem>>) attributes {dimension_semantics = [#tpu.dimension_semantics<parallel>], iteration_bounds = array<i64: 6>, scalar_prefetch = 0 : i64, scratch_operands = 0 : i64, tpu.core_type = #tpu.core_type<tc>, window_params = [{transform_indices = @transform_0, window_bounds = array<i64: 1, 16, 16>}, {transform_indices = @transform_1, window_bounds = array<i64: 1, 16, 16>}, {transform_indices = @transform_2, window_bounds = array<i64: 1, 1, 1>}]} {
    %c0 = arith.constant 0 : index
    %c0_0 = arith.constant 0 : index
    %c0_1 = arith.constant 0 : index
    %0 = vector.load %arg1[%c0, %c0_0, %c0_1] : memref<1x16x16xf32, #tpu.memory_space<vmem>>, vector<1x16x16xf32>
    %1 = vector.shape_cast %0 : vector<1x16x16xf32> to vector<16x16xf32>
    %c0_2 = arith.constant 0 : index
    %c0_3 = arith.constant 0 : index
    %c0_4 = arith.constant 0 : index
    %2 = vector.load %arg2[%c0_2, %c0_3, %c0_4] : memref<1x16x16xf32, #tpu.memory_space<vmem>>, vector<1x16x16xf32>
    %3 = vector.shape_cast %2 : vector<1x16x16xf32> to vector<16x16xf32>
    %4 = arith.subf %1, %3 : vector<16x16xf32>
    %5 = vector.extract_strided_slice %4 {offsets = [0, 1], sizes = [14, 14], strides = [1, 1]} : vector<16x16xf32> to vector<14x14xf32>
    %6 = vector.extract_strided_slice %4 {offsets = [2, 1], sizes = [14, 14], strides = [1, 1]} : vector<16x16xf32> to vector<14x14xf32>
    %7 = arith.addf %5, %6 : vector<14x14xf32>
    %8 = vector.extract_strided_slice %4 {offsets = [1, 0], sizes = [14, 14], strides = [1, 1]} : vector<16x16xf32> to vector<14x14xf32>
    %9 = arith.addf %7, %8 : vector<14x14xf32>
    %10 = vector.extract_strided_slice %4 {offsets = [1, 2], sizes = [14, 14], strides = [1, 1]} : vector<16x16xf32> to vector<14x14xf32>
    %11 = arith.addf %9, %10 : vector<14x14xf32>
    %12 = vector.extract_strided_slice %4 {offsets = [1, 1], sizes = [14, 14], strides = [1, 1]} : vector<16x16xf32> to vector<14x14xf32>
    %cst = arith.constant 4.000000e+00 : f32
    %13 = vector.broadcast %cst : f32 to vector<14x14xf32>
    %14 = arith.mulf %13, %12 : vector<14x14xf32>
    %15 = arith.subf %11, %14 : vector<14x14xf32>
    %16 = math.absf %15 : vector<14x14xf32>
    %17 = vector.shape_cast %16 : vector<14x14xf32> to vector<1x14x14xf32>
    %cst_5 = arith.constant dense<0.000000e+00> : vector<1xf32>
    %18 = vector.multi_reduction <add>, %17, %cst_5 [1, 2] : vector<1x14x14xf32> to vector<1xf32>
    %19 = vector.shape_cast %18 : vector<1xf32> to vector<1x1x1xf32>
    %20 = vector.extract %19[0, 0, 0] : f32 from vector<1x1x1xf32>
    %21 = vector.broadcast %20 : f32 to vector<1x1xf32>
    %c0_6 = arith.constant 0 : index
    %c0_7 = arith.constant 0 : index
    %c0_8 = arith.constant 0 : index
    %22 = vector.load %arg3[%c0_6, %c0_7, %c0_8] : memref<1x1x1xf32, #tpu.memory_space<vmem>>, vector<1x1x1xf32>
    %23 = vector.shape_cast %22 : vector<1x1x1xf32> to vector<1x1xf32>
    %24 = vector.shape_cast %21 : vector<1x1xf32> to vector<1x1x1xf32>
    tpu.vector_store %arg3[%c0_6, %c0_7, %c0_8], %24 {strides = array<i32>} : memref<1x1x1xf32, #tpu.memory_space<vmem>>, vector<1x1x1xf32>,
    return
  }
  func.func @transform_0(%arg0: i32) -> (i32, i32, i32) {
    %c0_i32 = arith.constant 0 : i32
    %c0_i32_0 = arith.constant 0 : i32
    %c0_i32_1 = arith.constant 0 : i32
    return %arg0, %c0_i32, %c0_i32_0 : i32, i32, i32
  }
  func.func @transform_1(%arg0: i32) -> (i32, i32, i32) {
    %c0_i32 = arith.constant 0 : i32
    %c0_i32_0 = arith.constant 0 : i32
    %c0_i32_1 = arith.constant 0 : i32
    return %arg0, %c0_i32, %c0_i32_0 : i32, i32, i32
  }
  func.func @transform_2(%arg0: i32) -> (i32, i32, i32) {
    %c0_i32 = arith.constant 0 : i32
    %c0_i32_0 = arith.constant 0 : i32
    %c0_i32_1 = arith.constant 0 : i32
    return %arg0, %c0_i32, %c0_i32_0 : i32, i32, i32
  }
}

</mosaic_0001>

<llo_original>
// kernel: tpu_custom_call.1
$region0: #{tpu_custom_call.1}
  #allocation0 [shape = 'u32[]', space=smem, size = 0x4, offset = 0x4, fixed_abs, tag = 'smem constant byte address 0x4 - core index']
  #allocation1 [shape = 'u32[144,128]{1,0:T(1,128)}', space=vmem, size = 0x12000, scoped, tag = 'internal scratch']
  %s0 = inlined_call_operand.hbm [shape: f32[6,16,16], index: 0, kind: input, shape index: {}]
  %s1 = inlined_call_operand.hbm [shape: f32[6,16,16], index: 1, kind: input, shape index: {}]
  %s2 = inlined_call_operand.vmem [shape: f32[6,1,1], index: 2, kind: output, shape index: {}]
  %s3 = sld [smem:[#allocation0]]
  $region49: #{tpu_custom_call.1} parent=0
    _
  %s5 = ssub.s32 1, %s3
  %s6 = scalar_select 0, %s5, %s3
  $region1: #{tpu_custom_call.1} parent=0
    #allocation2 [shape = 'u8[16384]{0}', space=vmem, size = 0x4000, scoped, tag = 'input window, operand 0']
    #allocation3 [shape = 's32[2]{0}', space=sflag, size = 0x8, scoped, tag = 'scoped memory for tpu_custom_call.1']
    #allocation4 [shape = 'u8[16384]{0}', space=vmem, size = 0x4000, scoped, tag = 'input window, operand 1']
    #allocation5 [shape = 's32[2]{0}', space=sflag, size = 0x8, scoped, tag = 'scoped memory for tpu_custom_call.1']
    %7 = vsyncpa [#allocation3], 0
    %s8 = scalar_lea.sflag [#allocation3], 1
    %9 = vsyncpa %s8, 0
    %10 = vsyncpa [#allocation5], 0
    %s11 = scalar_lea.sflag [#allocation5], 1
    %12 = vsyncpa %s11, 0
    loop: start=0, step=1, limit=8
    $region2: #{tpu_custom_call.1} parent=1 // loop_pre_header
      _
    $region3: #{tpu_custom_call.1} parent=1 // loop_header
      %s14 = sphi 0, %s18
      %p15 = scmp.ge.s32.totalorder %s14, 8
      %s24 = sphi 0, %s26
      %s27 = sphi 0, %s24
      %s28 = sphi 0, %s27
      %s44 = sphi 0, %s28
      %s50 = sphi 0, %s52
      %s53 = sphi 0, %s50
      %s54 = sphi 0, %s53
      %s70 = sphi 0, %s54
      %s76 = sphi 0, %s78
      %s79 = sphi 0, %s76
      %s80 = sphi 0, %s79
      %s96 = sphi 0, %s80
    $region4: #{tpu_custom_call.1} parent=1 // loop_header_branch
      %17 = sbr.rel (%p15) target = $region8
    $region5: #{tpu_custom_call.1} parent=1 // loop_body
      %s19 = ssub.s32 %s14, 1
      %s20 = ssub.s32 %s14, 2
      %s21 = sadd.s32 %s14, 1
      %s22 = ssub.s32 %s14, %s21
      %p23 = scmp.eq.s32.totalorder %s22, 0
      %s25 = sadd.s32 %s24, 1
      %s26 = scalar_select %p23, %s24, %s25
      %p29 = pneg %p23
      %p30 = scmp.eq.s32.totalorder %s14, 5
      %p31 = por %p29, %p30
      %p32 = scmp.ne.s32.totalorder %s24, %s27
      %p33 = scmp.eq.s32.totalorder %s14, 0
      %p34 = por %p32, %p33
      %p35 = scmp.ne.s32.totalorder %s24, %s27
      %p36 = scmp.eq.s32.totalorder %s19, 5
      %p37 = por %p35, %p36
      %p38 = scmp.ne.s32.totalorder %s27, %s28
      %p39 = scmp.eq.s32.totalorder %s19, 0
      %p40 = por %p38, %p39
      %p41 = scmp.ne.s32.totalorder %s27, %s28
      %p42 = scmp.eq.s32.totalorder %s20, 5
      %p43 = por %p41, %p42
      %p45 = scmp.ne.s32.totalorder %s28, %s44
      %p46 = scmp.eq.s32.totalorder %s20, 0
      %p47 = por %p45, %p46
      %s48 = ssub.s32 %s14, %s21
      %p49 = scmp.eq.s32.totalorder %s48, 0
      %s51 = sadd.s32 %s50, 1
      %s52 = scalar_select %p49, %s50, %s51
      %p55 = pneg %p49
      %p56 = scmp.eq.s32.totalorder %s14, 5
      %p57 = por %p55, %p56
      %p58 = scmp.ne.s32.totalorder %s50, %s53
      %p59 = scmp.eq.s32.totalorder %s14, 0
      %p60 = por %p58, %p59
      %p61 = scmp.ne.s32.totalorder %s50, %s53
      %p62 = scmp.eq.s32.totalorder %s19, 5
      %p63 = por %p61, %p62
      %p64 = scmp.ne.s32.totalorder %s53, %s54
      %p65 = scmp.eq.s32.totalorder %s19, 0
      %p66 = por %p64, %p65
      %p67 = scmp.ne.s32.totalorder %s53, %s54
      %p68 = scmp.eq.s32.totalorder %s20, 5
      %p69 = por %p67, %p68
      %p71 = scmp.ne.s32.totalorder %s54, %s70
      %p72 = scmp.eq.s32.totalorder %s20, 0
      %p73 = por %p71, %p72
      %s74 = ssub.s32 %s14, %s21
      %p75 = scmp.eq.s32.totalorder %s74, 0
      %s77 = sadd.s32 %s76, 1
      %s78 = scalar_select %p75, %s76, %s77
      %p81 = pneg %p75
      %p82 = scmp.eq.s32.totalorder %s14, 5
      %p83 = por %p81, %p82
      %p84 = scmp.ne.s32.totalorder %s76, %s79
      %p85 = scmp.eq.s32.totalorder %s14, 0
      %p86 = por %p84, %p85
      %p87 = scmp.ne.s32.totalorder %s76, %s79
      %p88 = scmp.eq.s32.totalorder %s19, 5
      %p89 = por %p87, %p88
      %p90 = scmp.ne.s32.totalorder %s79, %s80
      %p91 = scmp.eq.s32.totalorder %s19, 0
      %p92 = por %p90, %p91
      %p93 = scmp.ne.s32.totalorder %s79, %s80
      %p94 = scmp.eq.s32.totalorder %s20, 5
      %p95 = por %p93, %p94
      %p97 = scmp.ne.s32.totalorder %s80, %s96
      %p98 = scmp.eq.s32.totalorder %s20, 0
      %p99 = por %p97, %p98
      %p100 = scmp.le.s32.totalorder 1, %s14
      %p101 = scmp.lt.s32.totalorder %s14, 7
      %p102 = pnand %p100, %p101
      %p103 = pneg %p102
      // Predicated region
      $region9: #{tpu_custom_call.1} parent=5 // pred_check
        _
      $region10: #{tpu_custom_call.1} parent=5 // pred_check_branch
        %105 = sbr.rel (%p102) target = $region12
      $region11: #{tpu_custom_call.1} parent=5 // pred_region
        %s106 = ssub.s32 %s14, 1
      $region12: #{tpu_custom_call.1} parent=5 // pred_fallthru
        _
      %p107 = scmp.lt.s32.totalorder %s14, 6
      // Predicated region
      $region13: #{tpu_custom_call.1} parent=5 // pred_check
        %p108 = pneg %p107
      $region14: #{tpu_custom_call.1} parent=5 // pred_check_branch
        %110 = sbr.rel (%p108) target = $region16
      $region15: #{tpu_custom_call.1} parent=5 // pred_region
        // Predicated region
        $region17: #{tpu_custom_call.1} parent=15 // pred_check
          %p111 = pneg %p34
        $region18: #{tpu_custom_call.1} parent=15 // pred_check_branch
          %113 = sbr.rel (%p111) target = $region20
        $region19: #{tpu_custom_call.1} parent=15 // pred_region
          %s114 = sand.u32 %s24, 1
          %s115 = scalar_lea.sflag [#allocation3], %s114
          %s116 = sand.u32 %s24, 1
          %s117 = smul.addr %s116, 16
          %s118 = scalar_lea.vmem [#allocation2], %s117
          %s120 = ssub.s32 256, 256
          %121 = vsyncadd %s115, %s120
          %s122 = smul.addr %s14, 2
          %s123 = smul.addr %s122, 128
          %s124 = scalar_lea.hbm %s0, %s123
          %s125 = sshll.u32 %s118, 4
          %s126 = int_to_ptr.vmem [resolvable:$true] %s125
          %131 = dma.hbm_to_vmem [thread:$0]  %s124, 256, %s126, %s115, 128, 128, 8
        $region20: #{tpu_custom_call.1} parent=15 // pred_fallthru
          _
        // Predicated region
        $region21: #{tpu_custom_call.1} parent=15 // pred_check
          %p132 = pneg %p60
        $region22: #{tpu_custom_call.1} parent=15 // pred_check_branch
          %134 = sbr.rel (%p132) target = $region24
        $region23: #{tpu_custom_call.1} parent=15 // pred_region
          %s135 = sand.u32 %s50, 1
          %s136 = scalar_lea.sflag [#allocation5], %s135
          %s137 = sand.u32 %s50, 1
          %s138 = smul.addr %s137, 16
          %s139 = scalar_lea.vmem [#allocation4], %s138
          %s141 = ssub.s32 256, 256
          %142 = vsyncadd %s136, %s141
          %s143 = smul.addr %s14, 2
          %s144 = smul.addr %s143, 128
          %s145 = scalar_lea.hbm %s1, %s144
          %s146 = sshll.u32 %s139, 4
          %s147 = int_to_ptr.vmem [resolvable:$true] %s146
          %152 = dma.hbm_to_vmem [thread:$0]  %s145, 256, %s147, %s136, 128, 128, 8
        $region24: #{tpu_custom_call.1} parent=15 // pred_fallthru
          _
      $region16: #{tpu_custom_call.1} parent=5 // pred_fallthru
        _
      %p153 = scmp.le.s32.totalorder 1, %s14
      %p154 = scmp.lt.s32.totalorder %s14, 7
      %p155 = pnand %p153, %p154
      %p156 = pneg %p155
      // Predicated region
      $region25: #{tpu_custom_call.1} parent=5 // pred_check
        _
      $region26: #{tpu_custom_call.1} parent=5 // pred_check_branch
        %158 = sbr.rel (%p155) target = $region28
      $region27: #{tpu_custom_call.1} parent=5 // pred_region
        %s159 = ssub.s32 %s14, 1
        %s160 = sand.u32 %s27, 1
        %s161 = scalar_lea.sflag [#allocation3], %s160
        %s162 = sand.u32 %s27, 1
        %s163 = smul.addr %s162, 16
        %s164 = scalar_lea.vmem [#allocation2], %s163
        // Predicated region
        $region29: #{tpu_custom_call.1} parent=27 // pred_check
          %p165 = pneg %p40
        $region30: #{tpu_custom_call.1} parent=27 // pred_check_branch
          %167 = sbr.rel (%p165) target = $region32
        $region31: #{tpu_custom_call.1} parent=27 // pred_region
          %168 = dma.done %s161, 256
        $region32: #{tpu_custom_call.1} parent=27 // pred_fallthru
          _
        %s169 = sand.u32 %s53, 1
        %s170 = scalar_lea.sflag [#allocation5], %s169
        %s171 = sand.u32 %s53, 1
        %s172 = smul.addr %s171, 16
        %s173 = scalar_lea.vmem [#allocation4], %s172
        // Predicated region
        $region33: #{tpu_custom_call.1} parent=27 // pred_check
          %p174 = pneg %p66
        $region34: #{tpu_custom_call.1} parent=27 // pred_check_branch
          %176 = sbr.rel (%p174) target = $region36
        $region35: #{tpu_custom_call.1} parent=27 // pred_region
          %177 = dma.done %s170, 256
        $region36: #{tpu_custom_call.1} parent=27 // pred_fallthru
          _
        %s178 = sand.u32 %s27, 1
        %s179 = scalar_lea.sflag [#allocation3], %s178
        %s180 = sand.u32 %s27, 1
        %s181 = smul.addr %s180, 16
        %s182 = scalar_lea.vmem [#allocation2], %s181
        %p183 = pneg %p40
        %p184 = pneg %p37
        %s185 = sand.u32 %s53, 1
        %s186 = scalar_lea.sflag [#allocation5], %s185
        %s187 = sand.u32 %s53, 1
        %s188 = smul.addr %s187, 16
        %s189 = scalar_lea.vmem [#allocation4], %s188
        %p190 = pneg %p66
        %p191 = pneg %p63
        %p192 = pneg %p92
        %p193 = pneg %p89
        %p194 = scmp.lt.s32.totalorder %s19, 5
        %s195 = scalar_select %p194, %s19, 5
        %s196 = scalar_lea.vmem %s2, %s195
        %p197 = scmp.lt.s32.totalorder %s19, 5
        %s198 = scalar_select %p197, %s19, 5
        %s199 = scalar_lea.vmem %s2, %s198
        %v200 = vld [vmem:[%s164] sm:$0xff]
        %v201 = vld [vmem:[%s164 + $0x8] sm:$0xff]
        %v202 = vld [vmem:[%s173] sm:$0xff]
        %v203 = vld [vmem:[%s173 + $0x8] sm:$0xff]
        %v204 = vsub.f32 %v200, %v202
        %v205 = vsub.f32 %v201, %v203
        %vm208 = vcmask 1045504
        %v209 = vrot.slane %v204, 2
        %v210 = vrot.slane %v205, 2
        %v211 = vsel %vm208, %v209, %v210
        %v214 = vadd.f32 %v204, %v211
        %v215 = vadd.f32 %v205, %v210
        %vm216 = vcmask 1046528
        %v217 = vrot.slane %v204, 1
        %v218 = vrot.slane %v205, 1
        %v219 = vsel %vm216, %v217, %v218
        %220 = vrot.lane.b32.xlu0 %v219, 1
        %v221 = vpop.permute.xlu0 %220
        %222 = vrot.lane.b32.xlu0 %v218, 1
        %v223 = vpop.permute.xlu0 %222
        %v226 = vadd.f32 %v214, %v221
        %v227 = vadd.f32 %v215, %v223
        %228 = vrot.lane.b32.xlu0 %v219, 127
        %v229 = vpop.permute.xlu0 %228
        %230 = vrot.lane.b32.xlu0 %v218, 127
        %v231 = vpop.permute.xlu0 %230
        %v234 = vadd.f32 %v226, %v229
        %v235 = vadd.f32 %v227, %v231
        %v236 = vmul.f32 %v204, 4.0
        %v237 = vmul.f32 %v205, 4.0
        %v240 = vrot.slane %v236, 1
        %v241 = vrot.slane %v237, 1
        %v242 = vsel %vm216, %v240, %v241
        %v245 = vsub.f32 %v234, %v242
        %v246 = vsub.f32 %v235, %v241
        %v247 = vand.u32 2147483647, %v245
        %v248 = vand.u32 2147483647, %v246
        %251 = vrot.lane.b32.xlu0 %v247, 127
        %v252 = vpop.permute.xlu0 %251
        %253 = vrot.lane.b32.xlu0 %v248, 127
        %v254 = vpop.permute.xlu0 %253
        %vm257 = vcmask 113664
        %v258 = vsel %vm257, %v252, 0.0
        %vm259 = vcmask 111616
        %v260 = vsel %vm259, %v254, 0.0
        %v261 = vadd.f32 %v258, %v260
        %262 = vadd.xlane.f32.xlu0 %v261
        %v263 = vpop.xlane.xlu0 %262
        %v264 = vrot.slane %v263, 4
        %v265 = vadd.f32 %v263, %v264
        %v266 = vrot.slane %v265, 2
        %v267 = vadd.f32 %v265, %v266
        %v268 = vrot.slane %v267, 1
        %v269 = vadd.f32 %v267, %v268
        %s270 = vtos %v269
        %v271 = vstv %s270
        %vm272 = vcmask 0
        %273 = vst.msk [vmem:[%s199] sm:$0x1] %vm272, %v271
        %p274 = scmp.lt.s32.totalorder %s19, 5
        %s275 = scalar_select %p274, %s19, 5
        %s276 = scalar_lea.vmem %s2, %s275
        // Predicated region
        $region37: #{tpu_custom_call.1} parent=27 // pred_check
          %p277 = pneg %p89
        $region38: #{tpu_custom_call.1} parent=27 // pred_check_branch
          %279 = sbr.rel (%p277) target = $region40
        $region39: #{tpu_custom_call.1} parent=27 // pred_region
          _
        $region40: #{tpu_custom_call.1} parent=27 // pred_fallthru
          _
      $region28: #{tpu_custom_call.1} parent=5 // pred_fallthru
        _
      %p280 = scmp.le.s32.totalorder 2, %s14
      // Predicated region
      $region41: #{tpu_custom_call.1} parent=5 // pred_check
        %p281 = pneg %p280
      $region42: #{tpu_custom_call.1} parent=5 // pred_check_branch
        %283 = sbr.rel (%p281) target = $region44
      $region43: #{tpu_custom_call.1} parent=5 // pred_region
        %s284 = ssub.s32 %s14, 2
        // Predicated region
        $region45: #{tpu_custom_call.1} parent=43 // pred_check
          %p285 = pneg %p95
        $region46: #{tpu_custom_call.1} parent=43 // pred_check_branch
          %287 = sbr.rel (%p285) target = $region48
        $region47: #{tpu_custom_call.1} parent=43 // pred_region
          %p288 = scmp.lt.s32.totalorder %s20, 5
          %s289 = scalar_select %p288, %s20, 5
          %s290 = scalar_lea.vmem %s2, %s289
        $region48: #{tpu_custom_call.1} parent=43 // pred_fallthru
          _
      $region44: #{tpu_custom_call.1} parent=5 // pred_fallthru
        _
    $region6: #{tpu_custom_call.1} parent=1 // loop_footer
      %s18 = sadd.s32 1, %s14
    $region7: #{tpu_custom_call.1} parent=1 // loop_footer_branch
      %13 = sbr.rel target = $region3
    $region8: #{tpu_custom_call.1} parent=1 // loop_exit
      _
    %291 = vsyncpa [#allocation3], 1
    %s292 = scalar_lea.sflag [#allocation3], 1
    %293 = vsyncpa %s292, 1
    %294 = vsyncpa [#allocation5], 1
    %s295 = scalar_lea.sflag [#allocation5], 1
    %296 = vsyncpa %s295, 1

</llo_original>
